<compile_context>
chip_gen: v6e
topology: v6e:2x2x1
jax: 0.10.0
libtpu: 0.0.40
codegen_flags: <defaults>
</compile_context>

<pallas_src>
import functools

import jax
import jax.numpy as jnp
from jax.experimental import pallas as pl
from jax.experimental.pallas import tpu as pltpu


def _round_up(x, m):
    return (x + m - 1) // m * m


def _linear_kernel(x_ref, w_ref, b_ref, o_ref, acc_ref):
    k = pl.program_id(2)

    @pl.when(k == 0)
    def _():
        acc_ref[...] = jnp.zeros_like(acc_ref)

    acc_ref[...] += jnp.dot(
        x_ref[...], w_ref[...], preferred_element_type=jnp.float32
    )

    @pl.when(k == pl.num_programs(2) - 1)
    def _():
        # bias is already f32 (cast hoisted to the wrapper): one add + one cast.
        o_ref[...] = (acc_ref[...] + b_ref[...]).astype(o_ref.dtype)


def linear_pallas(x2d, w, b, *, tm=256, tn=256, tk=512):
    """x2d: (M, F), w: (F, H), b: (H,) -> (M, H).  Handles arbitrary M/F/H."""
    M, F = x2d.shape
    F_w, H = w.shape
    assert F_w == F, "weight must be (F, H)"

    # Effective tiles: clamp to the (padded) problem size.  Lane dims stay
    # multiples of 128 (lane-dense loads/stores); the row dim stays a multiple
    # of 16 (safe for bf16 sublane packing too).
    tm_eff = min(tm, _round_up(M, 16))
    tk_eff = min(tk, _round_up(F, 128))
    tn_eff = min(tn, _round_up(H, 128))

    M_pad = _round_up(M, tm_eff)
    F_pad = _round_up(F, tk_eff)
    H_pad = _round_up(H, tn_eff)

    x_p = x2d
    if (M_pad, F_pad) != (M, F):
        x_p = jnp.pad(x2d, ((0, M_pad - M), (0, F_pad - F)))
    w_p = w
    if (F_pad, H_pad) != (F, H):
        w_p = jnp.pad(w, ((0, F_pad - F), (0, H_pad - H)))
    b_p = b.astype(jnp.float32).reshape(1, H)
    if H_pad != H:
        b_p = jnp.pad(b_p, ((0, 0), (0, H_pad - H)))

    grid = (M_pad // tm_eff, H_pad // tn_eff, F_pad // tk_eff)

    out = pl.pallas_call(
        _linear_kernel,
        out_shape=jax.ShapeDtypeStruct((M_pad, H_pad), x2d.dtype),
        grid_spec=pltpu.PrefetchScalarGridSpec(
            num_scalar_prefetch=0,
            grid=grid,
            in_specs=[
                pl.BlockSpec((tm_eff, tk_eff), lambda i, j, k: (i, k)),  # x tile
                pl.BlockSpec((tk_eff, tn_eff), lambda i, j, k: (k, j)),  # w tile
                pl.BlockSpec((1, tn_eff), lambda i, j, k: (0, j)),       # bias tile
            ],
            out_specs=pl.BlockSpec((tm_eff, tn_eff), lambda i, j, k: (i, j)),
            scratch_shapes=[pltpu.VMEM((tm_eff, tn_eff), jnp.float32)],
        ),
        compiler_params=pltpu.CompilerParams(
            dimension_semantics=("parallel", "parallel", "arbitrary"),
            vmem_limit_bytes=48 * 1024 * 1024,
        ),
    )(x_p, w_p, b_p)

    if (M_pad, H_pad) != (M, H):
        out = out[:M, :H]
    return out


def time_distributed_linear(x, w, b, *, batch_first=True):
    """TimeDistributed(Linear) forward.

    x: (B, T, ..., F) if batch_first else (T, B, ..., F); <=2-D input is passed
    straight to the Linear, matching the torch module.  `batch_first` only
    controls which leading dims are folded; for a Linear the result/shape are
    identical either way, so the leading dims are preserved as given.
    """
    H = w.shape[1]

    if x.ndim <= 2:
        x2d = x if x.ndim == 2 else x[None, :]
        y = linear_pallas(x2d, w, b)
        return y if x.ndim == 2 else y[0]

    F = x.shape[-1]
    x2d = x.reshape(-1, F)                 # fold (batch, time, ...) together
    y2d = linear_pallas(x2d, w, b)         # (prod(leading), H)
    return y2d.reshape(x.shape[:-1] + (H,))  # unfold


if __name__ == "__main__":
    key = jax.random.PRNGKey(0)
    kx, kw, kb, kx2, kw2, kb2 = jax.random.split(key, 6)

    # Case 1: small aligned example, B=2, T=8, F=32, H=32.
    B, T, F, H = 2, 8, 32, 32
    x = jax.random.normal(kx, (B, T, F), dtype=jnp.float32)
    w = jax.random.normal(kw, (F, H), dtype=jnp.float32) * 0.1  # (F, H) == torch W.T
    b = jax.random.normal(kb, (H,), dtype=jnp.float32) * 0.1

    fwd = jax.jit(functools.partial(time_distributed_linear, batch_first=True))
    y = fwd(x, w, b)
    jax.block_until_ready(y)
    y_ref = (x.reshape(-1, F) @ w + b).reshape(B, T, H)
    assert y.shape == (B, T, H)
    assert jnp.allclose(y, y_ref, atol=1e-5, rtol=1e-5)

    # Case 2: non-aligned shapes exercise the padding / tail path (B*T=15, F=48, H=40).
    B2, T2, F2, H2 = 3, 5, 48, 40
    x2 = jax.random.normal(kx2, (B2, T2, F2), dtype=jnp.float32)
    w2 = jax.random.normal(kw2, (F2, H2), dtype=jnp.float32) * 0.1
    b2 = jax.random.normal(kb2, (H2,), dtype=jnp.float32) * 0.1
    y2 = fwd(x2, w2, b2)
    jax.block_until_ready(y2)
    y2_ref = (x2.reshape(-1, F2) @ w2 + b2).reshape(B2, T2, H2)
    assert y2.shape == (B2, T2, H2)
    assert jnp.allclose(y2, y2_ref, atol=1e-5, rtol=1e-5)

    # Case 3: <=2-D path (module applied directly).
    y3 = time_distributed_linear(x[0, 0], w, b)   # 1-D input -> 1-D output
    jax.block_until_ready(y3)
    assert y3.shape == (H,)
    assert jnp.allclose(y3, x[0, 0] @ w + b, atol=1e-5, rtol=1e-5)

    print("KERNEL_OK")
</pallas_src>

<mosaic_0001>
module attributes {stable_mosaic.version = 11 : i64} {
  func.func @_linear_kernel(%arg0: i32, %arg1: i32, %arg2: i32, %arg3: memref<16x128xf32, #tpu.memory_space<vmem>>, %arg4: memref<128x128xf32, #tpu.memory_space<vmem>>, %arg5: memref<1x128xf32, #tpu.memory_space<vmem>>, %arg6: memref<16x128xf32, #tpu.memory_space<vmem>>, %arg7: memref<16x128xf32, #tpu.memory_space<vmem>>) attributes {dimension_semantics = [#tpu.dimension_semantics<parallel>, #tpu.dimension_semantics<parallel>, #tpu.dimension_semantics<arbitrary>], iteration_bounds = array<i64: 1, 1, 1>, scalar_prefetch = 0 : i64, scratch_operands = 1 : i64, tpu.core_type = #tpu.core_type<tc>, window_params = [{transform_indices = @transform_0, window_bounds = array<i64: 16, 128>}, {transform_indices = @transform_1, window_bounds = array<i64: 128, 128>}, {transform_indices = @transform_2, window_bounds = array<i64: 1, 128>}, {transform_indices = @transform_3, window_bounds = array<i64: 16, 128>}]} {
    %c0_i32 = arith.constant 0 : i32
    %0 = arith.cmpi eq, %arg2, %c0_i32 : i32
    %1 = arith.extui %0 : i1 to i32
    %c0_i32_0 = arith.constant 0 : i32
    %2 = arith.cmpi ne, %1, %c0_i32_0 : i32
    scf.if %2 {
      %cst_10 = arith.constant 0.000000e+00 : f32
      %12 = vector.broadcast %cst_10 : f32 to vector<16x128xf32>
      %c0_11 = arith.constant 0 : index
      %c0_12 = arith.constant 0 : index
      %13 = vector.load %arg7[%c0_11, %c0_12] : memref<16x128xf32, #tpu.memory_space<vmem>>, vector<16x128xf32>
      tpu.vector_store %arg7[%c0_11, %c0_12], %12 {strides = array<i32>} : memref<16x128xf32, #tpu.memory_space<vmem>>, vector<16x128xf32>,
    } else {
    }
    %c0 = arith.constant 0 : index
    %c0_1 = arith.constant 0 : index
    %3 = vector.load %arg7[%c0, %c0_1] : memref<16x128xf32, #tpu.memory_space<vmem>>, vector<16x128xf32>
    %c0_2 = arith.constant 0 : index
    %c0_3 = arith.constant 0 : index
    %4 = vector.load %arg3[%c0_2, %c0_3] : memref<16x128xf32, #tpu.memory_space<vmem>>, vector<16x128xf32>
    %c0_4 = arith.constant 0 : index
    %c0_5 = arith.constant 0 : index
    %5 = vector.load %arg4[%c0_4, %c0_5] : memref<128x128xf32, #tpu.memory_space<vmem>>, vector<128x128xf32>
    %cst = arith.constant dense<0.000000e+00> : vector<16x128xf32>
    %6 = tpu.matmul %4, %5, %cst {dimension_numbers = #tpu.dot_dimension_numbers<[1], [0], [0], [1], [0, 0, 1, 1], [], []>} : vector<16x128xf32>, vector<128x128xf32>, vector<16x128xf32> -> vector<16x128xf32>
    %7 = arith.addf %3, %6 : vector<16x128xf32>
    %c0_6 = arith.constant 0 : index
    %c0_7 = arith.constant 0 : index
    %8 = vector.load %arg7[%c0_6, %c0_7] : memref<16x128xf32, #tpu.memory_space<vmem>>, vector<16x128xf32>
    tpu.vector_store %arg7[%c0_6, %c0_7], %7 {strides = array<i32>} : memref<16x128xf32, #tpu.memory_space<vmem>>, vector<16x128xf32>,
    %c0_i32_8 = arith.constant 0 : i32
    %9 = arith.cmpi eq, %arg2, %c0_i32_8 : i32
    %10 = arith.extui %9 : i1 to i32
    %c0_i32_9 = arith.constant 0 : i32
    %11 = arith.cmpi ne, %10, %c0_i32_9 : i32
    scf.if %11 {
      %c0_10 = arith.constant 0 : index
      %c0_11 = arith.constant 0 : index
      %12 = vector.load %arg7[%c0_10, %c0_11] : memref<16x128xf32, #tpu.memory_space<vmem>>, vector<16x128xf32>
      %c0_12 = arith.constant 0 : index
      %c0_13 = arith.constant 0 : index
      %13 = vector.load %arg5[%c0_12, %c0_13] : memref<1x128xf32, #tpu.memory_space<vmem>>, vector<1x128xf32>
      %14 = vector.broadcast %13 : vector<1x128xf32> to vector<16x128xf32>
      %15 = arith.addf %12, %14 : vector<16x128xf32>
      %c0_14 = arith.constant 0 : index
      %c0_15 = arith.constant 0 : index
      %16 = vector.load %arg6[%c0_14, %c0_15] : memref<16x128xf32, #tpu.memory_space<vmem>>, vector<16x128xf32>
      tpu.vector_store %arg6[%c0_14, %c0_15], %15 {strides = array<i32>} : memref<16x128xf32, #tpu.memory_space<vmem>>, vector<16x128xf32>,
    } else {
    }
    return
  }
  func.func @transform_0(%arg0: i32, %arg1: i32, %arg2: i32) -> (i32, i32) {
    %c0_i32 = arith.constant 0 : i32
    return %arg0, %arg2 : i32, i32
  }
  func.func @transform_1(%arg0: i32, %arg1: i32, %arg2: i32) -> (i32, i32) {
    %c0_i32 = arith.constant 0 : i32
    return %arg2, %arg1 : i32, i32
  }
  func.func @transform_2(%arg0: i32, %arg1: i32, %arg2: i32) -> (i32, i32) {
    %c0_i32 = arith.constant 0 : i32
    %c0_i32_0 = arith.constant 0 : i32
    return %c0_i32, %arg1 : i32, i32
  }
  func.func @transform_3(%arg0: i32, %arg1: i32, %arg2: i32) -> (i32, i32) {
    %c0_i32 = arith.constant 0 : i32
    return %arg0, %arg1 : i32, i32
  }
}

</mosaic_0001>

<llo_original>
// kernel: time_distributed_linear.1
$region0: #{time_distributed_linear.1}
  #allocation0 [shape = 'u32[]', space=smem, size = 0x4, offset = 0x4, fixed_abs, tag = 'smem constant byte address 0x4 - core index']
  #allocation1 [shape = 'u32[144,128]{1,0:T(1,128)}', space=vmem, size = 0x12000, scoped, tag = 'internal scratch']
  #allocation2 [shape = 'f32[16,128]{1,0:T(8,128)}', space=vmem, size = 0x2000, scoped, tag = 'scratch operand']
  %s0 = inlined_call_operand.vmem [shape: f32[16,128], index: 0, kind: input, shape index: {}]
  %s1 = inlined_call_operand.vmem [shape: f32[128,128], index: 1, kind: input, shape index: {}]
  %s2 = inlined_call_operand.vmem [shape: f32[1,128], index: 2, kind: input, shape index: {}]
  %s3 = inlined_call_operand.vmem [shape: f32[16,128], index: 3, kind: output, shape index: {}]
  %s4 = sld [smem:[#allocation0]]
  $region30: #{time_distributed_linear.1} parent=0
    _
  %s6 = ssub.s32 1, %s4
  %s7 = scalar_select 0, %s6, %s4
  // Predicated region
  $region2: #{time_distributed_linear.1} parent=0 // pred_check
    _
  $region3: #{time_distributed_linear.1} parent=0 // pred_check_branch
    %9 = sbr.rel (0) target = $region5
  $region4: #{time_distributed_linear.1} parent=0 // pred_region
    _
  $region5: #{time_distributed_linear.1} parent=0 // pred_fallthru
    _
  // Predicated region
  $region6: #{time_distributed_linear.1} parent=0 // pred_check
    _
  $region7: #{time_distributed_linear.1} parent=0 // pred_check_branch
    %11 = sbr.rel (0) target = $region9
  $region8: #{time_distributed_linear.1} parent=0 // pred_region
    _
  $region9: #{time_distributed_linear.1} parent=0 // pred_fallthru
    _
  // Predicated region
  $region10: #{time_distributed_linear.1} parent=0 // pred_check
    _
  $region11: #{time_distributed_linear.1} parent=0 // pred_check_branch
    %13 = sbr.rel (0) target = $region13
  $region12: #{time_distributed_linear.1} parent=0 // pred_region
    _
  $region13: #{time_distributed_linear.1} parent=0 // pred_fallthru
    _
  %p14 = scmp.eq.s32.totalorder 0, 0
  // Predicated region
  $region14: #{time_distributed_linear.1} parent=0 // pred_check
    %p15 = pneg %p14
  $region15: #{time_distributed_linear.1} parent=0 // pred_check_branch
    %17 = sbr.rel (%p15) target = $region17
  $region16: #{time_distributed_linear.1} parent=0 // pred_region
    %18 = vst [vmem:[#allocation2] sm:$0xff] 0.0
    %19 = vst [vmem:[#allocation2 + $0x8] sm:$0xff] 0.0
  $region17: #{time_distributed_linear.1} parent=0 // pred_fallthru
    _
  %v20 = vld [vmem:[#allocation2] sm:$0xff]
  %v21 = vld [vmem:[#allocation2 + $0x8] sm:$0xff]
  %v22 = vld [vmem:[%s0] sm:$0xff]
  %v23 = vld [vmem:[%s0 + $0x8] sm:$0xff]
  %v24 = vld [vmem:[%s1] sm:$0xff]
  %v25 = vld [vmem:[%s1 + $0x8] sm:$0xff]
  %v26 = vld [vmem:[%s1 + $0x10] sm:$0xff]
  %v27 = vld [vmem:[%s1 + $0x18] sm:$0xff]
  %v28 = vld [vmem:[%s1 + $0x20] sm:$0xff]
  %v29 = vld [vmem:[%s1 + $0x28] sm:$0xff]
  %v30 = vld [vmem:[%s1 + $0x30] sm:$0xff]
  %v31 = vld [vmem:[%s1 + $0x38] sm:$0xff]
  %v32 = vld [vmem:[%s1 + $0x40] sm:$0xff]
  %v33 = vld [vmem:[%s1 + $0x48] sm:$0xff]
  %v34 = vld [vmem:[%s1 + $0x50] sm:$0xff]
  %v35 = vld [vmem:[%s1 + $0x58] sm:$0xff]
  %v36 = vld [vmem:[%s1 + $0x60] sm:$0xff]
  %v37 = vld [vmem:[%s1 + $0x68] sm:$0xff]
  %v38 = vld [vmem:[%s1 + $0x70] sm:$0xff]
  %v39 = vld [vmem:[%s1 + $0x78] sm:$0xff]
  %40 = vmatprep.subr.mxu0 0.0
  %41 = vmatpush1.msra.mxu0 %v39
  %42 = vmatprep.subr.mxu0 0.0
  %43 = vmatpush1.msra.mxu0 %v38
  %44 = vmatprep.subr.mxu0 0.0
  %45 = vmatpush1.msra.mxu0 %v37
  %46 = vmatprep.subr.mxu0 0.0
  %47 = vmatpush1.msra.mxu0 %v36
  %48 = vmatprep.subr.mxu0 0.0
  %49 = vmatpush1.msra.mxu0 %v35
  %50 = vmatprep.subr.mxu0 0.0
  %51 = vmatpush1.msra.mxu0 %v34
  %52 = vmatprep.subr.mxu0 0.0
  %53 = vmatpush1.msra.mxu0 %v33
  %54 = vmatprep.subr.mxu0 0.0
  %55 = vmatpush1.msra.mxu0 %v32
  %56 = vmatprep.subr.mxu0 0.0
  %57 = vmatpush1.msra.mxu0 %v31
  %58 = vmatprep.subr.mxu0 0.0
  %59 = vmatpush1.msra.mxu0 %v30
  %60 = vmatprep.subr.mxu0 0.0
  %61 = vmatpush1.msra.mxu0 %v29
  %62 = vmatprep.subr.mxu0 0.0
  %63 = vmatpush1.msra.mxu0 %v28
  %64 = vmatprep.subr.mxu0 0.0
  %65 = vmatpush1.msra.mxu0 %v27
  %66 = vmatprep.subr.mxu0 0.0
  %67 = vmatpush1.msra.mxu0 %v26
  %68 = vmatprep.subr.mxu0 0.0
  %69 = vmatpush1.msra.mxu0 %v25
  %70 = vmatprep.subr.mxu0 0.0
  %71 = vmatpush1.msra.mxu0 %v24
  %72 = vmatprep.subr.mxu0 0.0
  %73 = vmatpush2.msra.mxu0 0.0
  %74 = vmatprep.subr.mxu0 0.0
  %75 = vmatpush2.msra.mxu0 0.0
  %76 = vmatprep.subr.mxu0 0.0
  %77 = vmatpush2.msra.mxu0 0.0
  %78 = vmatprep.subr.mxu0 0.0
  %79 = vmatpush2.msra.mxu0 0.0
  %80 = vmatprep.subr.mxu0 0.0
  %81 = vmatpush2.msra.mxu0 0.0
  %82 = vmatprep.subr.mxu0 0.0
  %83 = vmatpush2.msra.mxu0 0.0
  %84 = vmatprep.subr.mxu0 0.0
  %85 = vmatpush2.msra.mxu0 0.0
  %86 = vmatprep.subr.mxu0 0.0
  %87 = vmatpush2.msra.mxu0 0.0
  %88 = vmatprep.subr.mxu0 0.0
  %89 = vmatpush2.msra.mxu0 0.0
  %90 = vmatprep.subr.mxu0 0.0
  %91 = vmatpush2.msra.mxu0 0.0
  %92 = vmatprep.subr.mxu0 0.0
  %93 = vmatpush2.msra.mxu0 0.0
  %94 = vmatprep.subr.mxu0 0.0
  %95 = vmatpush2.msra.mxu0 0.0
  %96 = vmatprep.subr.mxu0 0.0
  %97 = vmatpush2.msra.mxu0 0.0
  %98 = vmatprep.subr.mxu0 0.0
  %99 = vmatpush2.msra.mxu0 0.0
  %100 = vmatprep.subr.mxu0 0.0
  %101 = vmatpush2.msra.mxu0 0.0
  %102 = vmatprep.subr.mxu0 0.0
  %103 = vmatpush2.msra.mxu0 0.0
  %104 = vmatprep.mubr.f32.mxu0 0.0
  %105 = vmatmul.mubr.f32.gmra.mxu0 %v22
  %v106 = vpop.f32.mrf.mxu0
  %v107 = vadd.f32 0.0, %v106
  %v108 = vpop.f32.mrf.mxu0
  %109 = vmatprep.mubr.f32.mxu0 0.0
  %110 = vmatmul.mubr.f32.gmra.mxu0 %v23
  %v111 = vpop.f32.mrf.mxu0
  %v112 = vadd.f32 0.0, %v111
  %v113 = vpop.f32.mrf.mxu0
  %114 = vdwg.mxu0
  %v115 = vadd.f32 %v20, %v107
  %v116 = vadd.f32 %v21, %v112
  %117 = vst [vmem:[#allocation2] sm:$0xff] %v115
  %118 = vst [vmem:[#allocation2 + $0x8] sm:$0xff] %v116
  // Predicated region
  $region18: #{time_distributed_linear.1} parent=0 // pred_check
    %p119 = pneg %p14
  $region19: #{time_distributed_linear.1} parent=0 // pred_check_branch
    %121 = sbr.rel (%p119) target = $region21
  $region20: #{time_distributed_linear.1} parent=0 // pred_region
    %v122 = vld [vmem:[#allocation2] sm:$0xff]
    %v123 = vld [vmem:[#allocation2 + $0x8] sm:$0xff]
    %v124 = vld [vmem:[%s2] sm:$0x1]
    %v126 = vlaneseq
    %v127 = vshrl.u32 %v126, 7
    %v128 = vsub.s32 0, %v127
    %v129 = vrot.slane %v124, %v128
    %v131 = vadd.f32 %v122, %v129
    %v132 = vadd.f32 %v123, %v129
    %133 = vst [vmem:[%s3] sm:$0xff] %v131
    %134 = vst [vmem:[%s3 + $0x8] sm:$0xff] %v132
  $region21: #{time_distributed_linear.1} parent=0 // pred_fallthru
    _
  // Predicated region
  $region22: #{time_distributed_linear.1} parent=0 // pred_check
    _
  $region23: #{time_distributed_linear.1} parent=0 // pred_check_branch
    %136 = sbr.rel (0) target = $region25
  $region24: #{time_distributed_linear.1} parent=0 // pred_region
    _
  $region25: #{time_distributed_linear.1} parent=0 // pred_fallthru
    _
  // Predicated region
  $region26: #{time_distributed_linear.1} parent=0 // pred_check
    _
  $region27: #{time_distributed_linear.1} parent=0 // pred_check_branch
    %138 = sbr.rel (0) target = $region29
  $region28: #{time_distributed_linear.1} parent=0 // pred_region
    _
  $region29: #{time_distributed_linear.1} parent=0 // pred_fallthru
    _

</llo_original>
